<compile_context>
chip_gen: v6e
topology: v6e:2x2x1
jax: 0.10.0
libtpu: 0.0.40
codegen_flags: <defaults>
</compile_context>

<pallas_src>
import jax
import jax.numpy as jnp
from jax.experimental import pallas as pl
from jax.experimental.pallas import tpu as pltpu


def _fused_conv(wt, x):
    """(Cout, C) @ (C, T) -> (Cout, T); VPU FMAs for tiny contraction dims, MXU otherwise."""
    cout, c = wt.shape
    if c <= 16:
        acc = wt[:, 0:1] * x[0:1, :]
        for k in range(1, c):
            acc = acc + wt[:, k:k + 1] * x[k:k + 1, :]
        return acc
    return jnp.dot(wt, x, preferred_element_type=jnp.float32)


def _stats_kernel(x_ref, wt_ref, b_ref, sum_ref, sq_ref):
    """Pass 1: accumulate per-channel sum and sum-of-squares of y = wT @ x + b."""
    @pl.when(jnp.logical_and(pl.program_id(0) == 0, pl.program_id(1) == 0))
    def _init():
        sum_ref[...] = jnp.zeros_like(sum_ref)
        sq_ref[...] = jnp.zeros_like(sq_ref)

    x = x_ref[...].astype(jnp.float32)                      # (C, TILE)
    y = _fused_conv(wt_ref[...], x) + b_ref[...]            # (Cout, TILE)
    sum_ref[...] += jnp.sum(y, axis=1, keepdims=True)
    sq_ref[...] += jnp.sum(y * y, axis=1, keepdims=True)


def _apply_kernel(x_ref, wt_ref, b_ref, o_ref):
    """Pass 2: BN scale/shift is pre-folded into wt/b, so this is relu(wt @ x + b)."""
    x = x_ref[...].astype(jnp.float32)                      # (C, TILE)
    y = _fused_conv(wt_ref[...], x) + b_ref[...]            # (Cout, TILE)
    o_ref[...] = jnp.maximum(y, 0.0).astype(o_ref.dtype)


def depthwise_conv(x_nchw, w1, b1, w2, b2, gamma, beta, *, eps=1e-3, max_tile_hw=2048):
    """w1: (Cin, Cin), w2: (Cin, Cout) in (in, out) matmul layout; biases/gamma/beta 1-D."""
    N, C, H, W = x_nchw.shape
    Cout = w2.shape[1]
    HW = H * W
    f32 = jnp.float32

    # --- fuse the two 1x1 convolutions (both linear) -------------------------------------
    w_fused = w1.astype(f32) @ w2.astype(f32)                       # (C, Cout)
    b_fused = b1.astype(f32) @ w2.astype(f32) + b2.astype(f32)      # (Cout,)
    wt = w_fused.T                                                  # (Cout, C)
    bcol = b_fused[:, None]                                         # (Cout, 1)

    # --- lane-dense tiling of the spatial axis (stay in NCHW) ----------------------------
    LANE = 128
    if HW <= max_tile_hw:
        hw_pad = ((HW + LANE - 1) // LANE) * LANE
        tile = hw_pad
    else:
        tile = max_tile_hw
        hw_pad = ((HW + tile - 1) // tile) * tile
    n_tiles = hw_pad // tile

    x3 = x_nchw.reshape(N, C, HW)
    if hw_pad != HW:
        x3 = jnp.pad(x3, ((0, 0), (0, 0), (0, hw_pad - HW)))

    grid = (N, n_tiles)
    x_spec = pl.BlockSpec((None, C, tile), lambda n, t: (n, 0, t))
    wt_spec = pl.BlockSpec((Cout, C), lambda n, t: (0, 0))
    b_spec = pl.BlockSpec((Cout, 1), lambda n, t: (0, 0))
    acc_spec = pl.BlockSpec((Cout, 1), lambda n, t: (0, 0))          # resident accumulator

    flops = 2 * N * hw_pad * C * Cout
    x_bytes = x3.size * x3.dtype.itemsize

    # --- pass 1: global per-channel sum / sum-of-squares ---------------------------------
    sum_raw, sq_raw = pl.pallas_call(
        _stats_kernel,
        grid=grid,
        in_specs=[x_spec, wt_spec, b_spec],
        out_specs=[acc_spec, acc_spec],
        out_shape=[jax.ShapeDtypeStruct((Cout, 1), f32),
                   jax.ShapeDtypeStruct((Cout, 1), f32)],
        compiler_params=pltpu.CompilerParams(
            dimension_semantics=("arbitrary", "arbitrary"),
            vmem_limit_bytes=32 * 1024 * 1024),
        cost_estimate=pl.CostEstimate(
            flops=flops, transcendentals=0, bytes_accessed=x_bytes),
    )(x3, wt, bcol)

    # --- BatchNorm statistics (training mode: batch stats, biased variance) --------------
    m_total = N * HW
    n_pad_cols = N * (hw_pad - HW)              # zero-padded columns produce y == b_fused
    sum_y = sum_raw[:, 0] - n_pad_cols * b_fused
    sq_y = sq_raw[:, 0] - n_pad_cols * b_fused * b_fused
    mean = sum_y / m_total
    var = jnp.maximum(sq_y / m_total - mean * mean, 0.0)
    inv = jax.lax.rsqrt(var + eps)
    scale = gamma.astype(f32) * inv                                  # (Cout,)
    shift = beta.astype(f32) - mean * scale                          # (Cout,)

    # fold BN scale/shift into the fused conv weight/bias (pass 2 becomes a pure FMA+ReLU)
    wt_bn = wt * scale[:, None]                                      # (Cout, C)
    b_bn = (b_fused * scale + shift)[:, None]                        # (Cout, 1)

    # --- pass 2: out = relu(wt_bn @ x + b_bn) ---------------------------------------------
    out3 = pl.pallas_call(
        _apply_kernel,
        grid=grid,
        in_specs=[x_spec, wt_spec, b_spec],
        out_specs=pl.BlockSpec((None, Cout, tile), lambda n, t: (n, 0, t)),
        out_shape=jax.ShapeDtypeStruct((N, Cout, hw_pad), x_nchw.dtype),
        compiler_params=pltpu.CompilerParams(
            dimension_semantics=("parallel", "parallel"),
            vmem_limit_bytes=32 * 1024 * 1024),
        cost_estimate=pl.CostEstimate(
            flops=flops, transcendentals=0,
            bytes_accessed=x_bytes + N * Cout * hw_pad * x_nchw.dtype.itemsize),
    )(x3, wt_bn, b_bn)

    return out3[:, :, :HW].reshape(N, Cout, H, W)


def reference_forward(x_nchw, w1, b1, w2, b2, gamma, beta):
    """Pure-JAX reference of the module's math (training-mode BN), for correctness check."""
    N, C, H, W = x_nchw.shape
    x2 = jnp.transpose(x_nchw, (0, 2, 3, 1)).reshape(-1, C).astype(jnp.float32)
    y = x2 @ w1 + b1
    y = y @ w2 + b2
    mean = y.mean(axis=0)
    var = ((y - mean) ** 2).mean(axis=0)
    y = (y - mean) / jnp.sqrt(var + 0.001) * gamma + beta
    y = jnp.maximum(y, 0.0)
    Cout = w2.shape[1]
    return jnp.transpose(y.reshape(N, H, W, Cout), (0, 3, 1, 2)).astype(x_nchw.dtype)


if __name__ == "__main__":
    # Small shapes consistent with the module: batch=2, channels=4, spatial=16.
    N, C, H, W = 2, 4, 16, 16
    Cout = C  # out_channels defaults to in_channels

    key = jax.random.PRNGKey(0)
    k_x, k_w1, k_b1, k_w2, k_b2 = jax.random.split(key, 5)

    x = jax.random.normal(k_x, (N, C, H, W), dtype=jnp.float32)

    # Parameters in (in, out) matmul layout (PyTorch conv weight (out,in,1,1) transposed).
    w1 = 0.1 * jax.random.normal(k_w1, (C, C), dtype=jnp.float32)
    b1 = 0.1 * jax.random.normal(k_b1, (C,), dtype=jnp.float32)
    w2 = 0.1 * jax.random.normal(k_w2, (C, Cout), dtype=jnp.float32)
    b2 = 0.1 * jax.random.normal(k_b2, (Cout,), dtype=jnp.float32)
    gamma = jnp.ones((Cout,), dtype=jnp.float32)   # BatchNorm2d default weight
    beta = jnp.zeros((Cout,), dtype=jnp.float32)   # BatchNorm2d default bias

    out = depthwise_conv(x, w1, b1, w2, b2, gamma, beta)
    out = jax.block_until_ready(out)

    ref = reference_forward(x, w1, b1, w2, b2, gamma, beta)
    assert out.shape == (N, Cout, H, W)
    assert jnp.allclose(out, ref, atol=1e-4, rtol=1e-4), "Pallas kernel mismatch vs reference"

    print("KERNEL_OK")
</pallas_src>

<mosaic_0001>
module attributes {stable_mosaic.version = 11 : i64} {
  func.func @_stats_kernel(%arg0: i32, %arg1: i32, %arg2: memref<1x4x256xf32, #tpu.memory_space<vmem>>, %arg3: memref<4x4xf32, #tpu.memory_space<vmem>>, %arg4: memref<4x1xf32, #tpu.memory_space<vmem>>, %arg5: memref<4x1xf32, #tpu.memory_space<vmem>>, %arg6: memref<4x1xf32, #tpu.memory_space<vmem>>) attributes {dimension_semantics = [#tpu.dimension_semantics<arbitrary>, #tpu.dimension_semantics<arbitrary>], iteration_bounds = array<i64: 2, 1>, scalar_prefetch = 0 : i64, scratch_operands = 0 : i64, tpu.core_type = #tpu.core_type<tc>, window_params = [{transform_indices = @transform_0, window_bounds = array<i64: 1, 4, 256>}, {pipeline_mode = #tpu.pipeline_mode<synchronous>, transform_indices = @transform_1, window_bounds = array<i64: 4, 4>}, {pipeline_mode = #tpu.pipeline_mode<synchronous>, transform_indices = @transform_2, window_bounds = array<i64: 4, 1>}, {pipeline_mode = #tpu.pipeline_mode<synchronous>, transform_indices = @transform_3, window_bounds = array<i64: 4, 1>}, {pipeline_mode = #tpu.pipeline_mode<synchronous>, transform_indices = @transform_4, window_bounds = array<i64: 4, 1>}]} {
    %c0_i32 = arith.constant 0 : i32
    %0 = arith.cmpi eq, %arg0, %c0_i32 : i32
    %c0_i32_0 = arith.constant 0 : i32
    %1 = arith.cmpi eq, %arg1, %c0_i32_0 : i32
    %2 = arith.andi %0, %1 : i1
    %3 = arith.extui %2 : i1 to i32
    %c0_i32_1 = arith.constant 0 : i32
    %4 = arith.cmpi ne, %3, %c0_i32_1 : i32
    scf.if %4 {
      %cst_17 = arith.constant 0.000000e+00 : f32
      %45 = vector.broadcast %cst_17 : f32 to vector<4x1xf32>
      %c0_18 = arith.constant 0 : index
      %c0_19 = arith.constant 0 : index
      %46 = vector.load %arg5[%c0_18, %c0_19] : memref<4x1xf32, #tpu.memory_space<vmem>>, vector<4x1xf32>
      tpu.vector_store %arg5[%c0_18, %c0_19], %45 {strides = array<i32>} : memref<4x1xf32, #tpu.memory_space<vmem>>, vector<4x1xf32>,
      %cst_20 = arith.constant 0.000000e+00 : f32
      %47 = vector.broadcast %cst_20 : f32 to vector<4x1xf32>
      %c0_21 = arith.constant 0 : index
      %c0_22 = arith.constant 0 : index
      %48 = vector.load %arg6[%c0_21, %c0_22] : memref<4x1xf32, #tpu.memory_space<vmem>>, vector<4x1xf32>
      tpu.vector_store %arg6[%c0_21, %c0_22], %47 {strides = array<i32>} : memref<4x1xf32, #tpu.memory_space<vmem>>, vector<4x1xf32>,
    } else {
    }
    %c0 = arith.constant 0 : index
    %c0_2 = arith.constant 0 : index
    %c0_3 = arith.constant 0 : index
    %5 = vector.load %arg2[%c0, %c0_2, %c0_3] : memref<1x4x256xf32, #tpu.memory_space<vmem>>, vector<1x4x256xf32>
    %6 = vector.shape_cast %5 : vector<1x4x256xf32> to vector<4x256xf32>
    %c0_4 = arith.constant 0 : index
    %c0_5 = arith.constant 0 : index
    %7 = vector.load %arg3[%c0_4, %c0_5] : memref<4x4xf32, #tpu.memory_space<vmem>>, vector<4x4xf32>
    %8 = vector.extract_strided_slice %7 {offsets = [0, 0], sizes = [4, 1], strides = [1, 1]} : vector<4x4xf32> to vector<4x1xf32>
    %9 = vector.extract_strided_slice %6 {offsets = [0, 0], sizes = [1, 256], strides = [1, 1]} : vector<4x256xf32> to vector<1x256xf32>
    %10 = vector.broadcast %8 : vector<4x1xf32> to vector<4x256xf32>
    %11 = vector.broadcast %9 : vector<1x256xf32> to vector<4x256xf32>
    %12 = arith.mulf %10, %11 : vector<4x256xf32>
    %13 = vector.extract_strided_slice %7 {offsets = [0, 1], sizes = [4, 1], strides = [1, 1]} : vector<4x4xf32> to vector<4x1xf32>
    %14 = vector.extract_strided_slice %6 {offsets = [1, 0], sizes = [1, 256], strides = [1, 1]} : vector<4x256xf32> to vector<1x256xf32>
    %15 = vector.broadcast %13 : vector<4x1xf32> to vector<4x256xf32>
    %16 = vector.broadcast %14 : vector<1x256xf32> to vector<4x256xf32>
    %17 = arith.mulf %15, %16 : vector<4x256xf32>
    %18 = arith.addf %12, %17 : vector<4x256xf32>
    %19 = vector.extract_strided_slice %7 {offsets = [0, 2], sizes = [4, 1], strides = [1, 1]} : vector<4x4xf32> to vector<4x1xf32>
    %20 = vector.extract_strided_slice %6 {offsets = [2, 0], sizes = [1, 256], strides = [1, 1]} : vector<4x256xf32> to vector<1x256xf32>
    %21 = vector.broadcast %19 : vector<4x1xf32> to vector<4x256xf32>
    %22 = vector.broadcast %20 : vector<1x256xf32> to vector<4x256xf32>
    %23 = arith.mulf %21, %22 : vector<4x256xf32>
    %24 = arith.addf %18, %23 : vector<4x256xf32>
    %25 = vector.extract_strided_slice %7 {offsets = [0, 3], sizes = [4, 1], strides = [1, 1]} : vector<4x4xf32> to vector<4x1xf32>
    %26 = vector.extract_strided_slice %6 {offsets = [3, 0], sizes = [1, 256], strides = [1, 1]} : vector<4x256xf32> to vector<1x256xf32>
    %27 = vector.broadcast %25 : vector<4x1xf32> to vector<4x256xf32>
    %28 = vector.broadcast %26 : vector<1x256xf32> to vector<4x256xf32>
    %29 = arith.mulf %27, %28 : vector<4x256xf32>
    %30 = arith.addf %24, %29 : vector<4x256xf32>
    %c0_6 = arith.constant 0 : index
    %c0_7 = arith.constant 0 : index
    %31 = vector.load %arg4[%c0_6, %c0_7] : memref<4x1xf32, #tpu.memory_space<vmem>>, vector<4x1xf32>
    %32 = vector.broadcast %31 : vector<4x1xf32> to vector<4x256xf32>
    %33 = arith.addf %30, %32 : vector<4x256xf32>
    %c0_8 = arith.constant 0 : index
    %c0_9 = arith.constant 0 : index
    %34 = vector.load %arg5[%c0_8, %c0_9] : memref<4x1xf32, #tpu.memory_space<vmem>>, vector<4x1xf32>
    %cst = arith.constant dense<0.000000e+00> : vector<4xf32>
    %35 = vector.multi_reduction <add>, %33, %cst [1] : vector<4x256xf32> to vector<4xf32>
    %36 = vector.shape_cast %35 : vector<4xf32> to vector<4x1xf32>
    %37 = arith.addf %34, %36 : vector<4x1xf32>
    %c0_10 = arith.constant 0 : index
    %c0_11 = arith.constant 0 : index
    %38 = vector.load %arg5[%c0_10, %c0_11] : memref<4x1xf32, #tpu.memory_space<vmem>>, vector<4x1xf32>
    tpu.vector_store %arg5[%c0_10, %c0_11], %37 {strides = array<i32>} : memref<4x1xf32, #tpu.memory_space<vmem>>, vector<4x1xf32>,
    %c0_12 = arith.constant 0 : index
    %c0_13 = arith.constant 0 : index
    %39 = vector.load %arg6[%c0_12, %c0_13] : memref<4x1xf32, #tpu.memory_space<vmem>>, vector<4x1xf32>
    %40 = arith.mulf %33, %33 : vector<4x256xf32>
    %cst_14 = arith.constant dense<0.000000e+00> : vector<4xf32>
    %41 = vector.multi_reduction <add>, %40, %cst_14 [1] : vector<4x256xf32> to vector<4xf32>
    %42 = vector.shape_cast %41 : vector<4xf32> to vector<4x1xf32>
    %43 = arith.addf %39, %42 : vector<4x1xf32>
    %c0_15 = arith.constant 0 : index
    %c0_16 = arith.constant 0 : index
    %44 = vector.load %arg6[%c0_15, %c0_16] : memref<4x1xf32, #tpu.memory_space<vmem>>, vector<4x1xf32>
    tpu.vector_store %arg6[%c0_15, %c0_16], %43 {strides = array<i32>} : memref<4x1xf32, #tpu.memory_space<vmem>>, vector<4x1xf32>,
    return
  }
  func.func @transform_0(%arg0: i32, %arg1: i32) -> (i32, i32, i32) {
    %c0_i32 = arith.constant 0 : i32
    %c0_i32_0 = arith.constant 0 : i32
    return %arg0, %c0_i32, %arg1 : i32, i32, i32
  }
  func.func @transform_1(%arg0: i32, %arg1: i32) -> (i32, i32) {
    %c0_i32 = arith.constant 0 : i32
    %c0_i32_0 = arith.constant 0 : i32
    %c0_i32_1 = arith.constant 0 : i32
    return %c0_i32, %c0_i32_0 : i32, i32
  }
  func.func @transform_2(%arg0: i32, %arg1: i32) -> (i32, i32) {
    %c0_i32 = arith.constant 0 : i32
    %c0_i32_0 = arith.constant 0 : i32
    %c0_i32_1 = arith.constant 0 : i32
    return %c0_i32, %c0_i32_0 : i32, i32
  }
  func.func @transform_3(%arg0: i32, %arg1: i32) -> (i32, i32) {
    %c0_i32 = arith.constant 0 : i32
    %c0_i32_0 = arith.constant 0 : i32
    %c0_i32_1 = arith.constant 0 : i32
    return %c0_i32, %c0_i32_0 : i32, i32
  }
  func.func @transform_4(%arg0: i32, %arg1: i32) -> (i32, i32) {
    %c0_i32 = arith.constant 0 : i32
    %c0_i32_0 = arith.constant 0 : i32
    %c0_i32_1 = arith.constant 0 : i32
    return %c0_i32, %c0_i32_0 : i32, i32
  }
}

</mosaic_0001>

<llo_original>
// kernel: tpu_custom_call.1
$region0: #{tpu_custom_call.1}
  #allocation0 [shape = 'u32[]', space=smem, size = 0x4, offset = 0x4, fixed_abs, tag = 'smem constant byte address 0x4 - core index']
  #allocation1 [shape = 'u32[144,128]{1,0:T(1,128)}', space=vmem, size = 0x12000, scoped, tag = 'internal scratch']
  %s0 = inlined_call_operand.hbm [shape: f32[2,4,256], index: 0, kind: input, shape index: {}]
  %s1 = inlined_call_operand.vmem [shape: f32[4,4], index: 1, kind: input, shape index: {}]
  %s2 = inlined_call_operand.vmem [shape: f32[4,1], index: 2, kind: input, shape index: {}]
  %s3 = inlined_call_operand.vmem [shape: f32[4,1], index: 3, kind: output, shape index: {0}]
  %s4 = inlined_call_operand.vmem [shape: f32[4,1], index: 4, kind: output, shape index: {1}]
  %5 = xla_tuple %s3, %s4
  %s6 = sld [smem:[#allocation0]]
  $region61: #{tpu_custom_call.1} parent=0
    _
  %s8 = ssub.s32 1, %s6
  %s9 = scalar_select 0, %s8, %s6
  $region1: #{tpu_custom_call.1} parent=0
    #allocation2 [shape = 'u8[8192]{0}', space=vmem, size = 0x2000, scoped, tag = 'input window, operand 0']
    #allocation3 [shape = 's32[2]{0}', space=sflag, size = 0x8, scoped, tag = 'scoped memory for tpu_custom_call.1']
    %10 = vsyncpa [#allocation3], 0
    %s11 = scalar_lea.sflag [#allocation3], 1
    %12 = vsyncpa %s11, 0
    loop: start=0, step=1, limit=4
    $region2: #{tpu_custom_call.1} parent=1 // loop_pre_header
      _
    $region3: #{tpu_custom_call.1} parent=1 // loop_header
      %s14 = sphi 0, %s18
      %p15 = scmp.ge.s32.totalorder %s14, 4
      %s21 = sphi 0, %s33
      %s22 = sphi 0, %s29
      %s23 = sphi 0, %s21
      %s24 = sphi 0, %s22
      %s25 = sphi 0, %s23
      %s26 = sphi 0, %s24
      %s38 = sphi 0, %s40
      %s41 = sphi 0, %s38
      %s42 = sphi 0, %s41
      %s58 = sphi 0, %s42
      %s62 = sphi 0, %s62
      %s64 = sphi 0, %s62
      %s65 = sphi 0, %s64
      %s79 = sphi 0, %s65
      %s83 = sphi 0, %s83
      %s85 = sphi 0, %s83
      %s86 = sphi 0, %s85
      %s100 = sphi 0, %s86
      %s104 = sphi 0, %s104
      %s106 = sphi 0, %s104
      %s107 = sphi 0, %s106
      %s121 = sphi 0, %s107
      %s125 = sphi 0, %s125
      %s127 = sphi 0, %s125
      %s128 = sphi 0, %s127
      %s142 = sphi 0, %s128
    $region4: #{tpu_custom_call.1} parent=1 // loop_header_branch
      %17 = sbr.rel (%p15) target = $region8
    $region5: #{tpu_custom_call.1} parent=1 // loop_body
      %s19 = ssub.s32 %s14, 1
      %s20 = ssub.s32 %s14, 2
      %s27 = sadd.s32 1, %s22
      %p28 = scmp.ge.s32.totalorder %s27, 1
      %s29 = scalar_select %p28, 0, %s27
      %s30 = sadd.s32 1, %s21
      %s31 = scalar_select %p28, %s30, %s21
      %p32 = scmp.ge.s32.totalorder %s31, 2
      %s33 = scalar_select %p32, 0, %s31
      %s34 = ssub.s32 %s21, %s33
      %s35 = ssub.s32 %s22, %s29
      %s36 = sor.u32 %s34, %s35
      %p37 = scmp.eq.s32.totalorder %s36, 0
      %s39 = sadd.s32 %s38, 1
      %s40 = scalar_select %p37, %s38, %s39
      %p43 = pneg %p37
      %p44 = scmp.eq.s32.totalorder %s14, 1
      %p45 = por %p43, %p44
      %p46 = scmp.ne.s32.totalorder %s38, %s41
      %p47 = scmp.eq.s32.totalorder %s14, 0
      %p48 = por %p46, %p47
      %p49 = scmp.ne.s32.totalorder %s38, %s41
      %p50 = scmp.eq.s32.totalorder %s19, 1
      %p51 = por %p49, %p50
      %p52 = scmp.ne.s32.totalorder %s41, %s42
      %p53 = scmp.eq.s32.totalorder %s19, 0
      %p54 = por %p52, %p53
      %p55 = scmp.ne.s32.totalorder %s41, %s42
      %p56 = scmp.eq.s32.totalorder %s20, 1
      %p57 = por %p55, %p56
      %p59 = scmp.ne.s32.totalorder %s42, %s58
      %p60 = scmp.eq.s32.totalorder %s20, 0
      %p61 = por %p59, %p60
      %s63 = sadd.s32 %s62, 1
      %p66 = scmp.eq.s32.totalorder %s14, 1
      %p67 = scmp.ne.s32.totalorder %s62, %s64
      %p68 = scmp.eq.s32.totalorder %s14, 0
      %p69 = por %p67, %p68
      %p70 = scmp.ne.s32.totalorder %s62, %s64
      %p71 = scmp.eq.s32.totalorder %s19, 1
      %p72 = por %p70, %p71
      %p73 = scmp.ne.s32.totalorder %s64, %s65
      %p74 = scmp.eq.s32.totalorder %s19, 0
      %p75 = por %p73, %p74
      %p76 = scmp.ne.s32.totalorder %s64, %s65
      %p77 = scmp.eq.s32.totalorder %s20, 1
      %p78 = por %p76, %p77
      %p80 = scmp.ne.s32.totalorder %s65, %s79
      %p81 = scmp.eq.s32.totalorder %s20, 0
      %p82 = por %p80, %p81
      %s84 = sadd.s32 %s83, 1
      %p87 = scmp.eq.s32.totalorder %s14, 1
      %p88 = scmp.ne.s32.totalorder %s83, %s85
      %p89 = scmp.eq.s32.totalorder %s14, 0
      %p90 = por %p88, %p89
      %p91 = scmp.ne.s32.totalorder %s83, %s85
      %p92 = scmp.eq.s32.totalorder %s19, 1
      %p93 = por %p91, %p92
      %p94 = scmp.ne.s32.totalorder %s85, %s86
      %p95 = scmp.eq.s32.totalorder %s19, 0
      %p96 = por %p94, %p95
      %p97 = scmp.ne.s32.totalorder %s85, %s86
      %p98 = scmp.eq.s32.totalorder %s20, 1
      %p99 = por %p97, %p98
      %p101 = scmp.ne.s32.totalorder %s86, %s100
      %p102 = scmp.eq.s32.totalorder %s20, 0
      %p103 = por %p101, %p102
      %s105 = sadd.s32 %s104, 1
      %p108 = scmp.eq.s32.totalorder %s14, 1
      %p109 = scmp.ne.s32.totalorder %s104, %s106
      %p110 = scmp.eq.s32.totalorder %s14, 0
      %p111 = por %p109, %p110
      %p112 = scmp.ne.s32.totalorder %s104, %s106
      %p113 = scmp.eq.s32.totalorder %s19, 1
      %p114 = por %p112, %p113
      %p115 = scmp.ne.s32.totalorder %s106, %s107
      %p116 = scmp.eq.s32.totalorder %s19, 0
      %p117 = por %p115, %p116
      %p118 = scmp.ne.s32.totalorder %s106, %s107
      %p119 = scmp.eq.s32.totalorder %s20, 1
      %p120 = por %p118, %p119
      %p122 = scmp.ne.s32.totalorder %s107, %s121
      %p123 = scmp.eq.s32.totalorder %s20, 0
      %p124 = por %p122, %p123
      %s126 = sadd.s32 %s125, 1
      %p129 = scmp.eq.s32.totalorder %s14, 1
      %p130 = scmp.ne.s32.totalorder %s125, %s127
      %p131 = scmp.eq.s32.totalorder %s14, 0
      %p132 = por %p130, %p131
      %p133 = scmp.ne.s32.totalorder %s125, %s127
      %p134 = scmp.eq.s32.totalorder %s19, 1
      %p135 = por %p133, %p134
      %p136 = scmp.ne.s32.totalorder %s127, %s128
      %p137 = scmp.eq.s32.totalorder %s19, 0
      %p138 = por %p136, %p137
      %p139 = scmp.ne.s32.totalorder %s127, %s128
      %p140 = scmp.eq.s32.totalorder %s20, 1
      %p141 = por %p139, %p140
      %p143 = scmp.ne.s32.totalorder %s128, %s142
      %p144 = scmp.eq.s32.totalorder %s20, 0
      %p145 = por %p143, %p144
      %p146 = scmp.le.s32.totalorder 1, %s14
      %p147 = scmp.lt.s32.totalorder %s14, 3
      %p148 = pnand %p146, %p147
      %p149 = pneg %p148
      // Predicated region
      $region9: #{tpu_custom_call.1} parent=5 // pred_check
        _
      $region10: #{tpu_custom_call.1} parent=5 // pred_check_branch
        %151 = sbr.rel (%p148) target = $region12
      $region11: #{tpu_custom_call.1} parent=5 // pred_region
        %s152 = ssub.s32 %s14, 1
        // Predicated region
        $region13: #{tpu_custom_call.1} parent=11 // pred_check
          %p153 = pneg %p75
        $region14: #{tpu_custom_call.1} parent=11 // pred_check_branch
          %155 = sbr.rel (%p153) target = $region16
        $region15: #{tpu_custom_call.1} parent=11 // pred_region
          _
        $region16: #{tpu_custom_call.1} parent=11 // pred_fallthru
          _
        // Predicated region
        $region17: #{tpu_custom_call.1} parent=11 // pred_check
          %p156 = pneg %p96
        $region18: #{tpu_custom_call.1} parent=11 // pred_check_branch
          %158 = sbr.rel (%p156) target = $region20
        $region19: #{tpu_custom_call.1} parent=11 // pred_region
          _
        $region20: #{tpu_custom_call.1} parent=11 // pred_fallthru
          _
      $region12: #{tpu_custom_call.1} parent=5 // pred_fallthru
        _
      %p159 = scmp.lt.s32.totalorder %s14, 2
      // Predicated region
      $region21: #{tpu_custom_call.1} parent=5 // pred_check
        %p160 = pneg %p159
      $region22: #{tpu_custom_call.1} parent=5 // pred_check_branch
        %162 = sbr.rel (%p160) target = $region24
      $region23: #{tpu_custom_call.1} parent=5 // pred_region
        // Predicated region
        $region25: #{tpu_custom_call.1} parent=23 // pred_check
          %p163 = pneg %p48
        $region26: #{tpu_custom_call.1} parent=23 // pred_check_branch
          %165 = sbr.rel (%p163) target = $region28
        $region27: #{tpu_custom_call.1} parent=23 // pred_region
          %s166 = sand.u32 %s38, 1
          %s167 = scalar_lea.sflag [#allocation3], %s166
          %s168 = sand.u32 %s38, 1
          %s169 = smul.addr %s168, 8
          %s170 = scalar_lea.vmem [#allocation2], %s169
          %s171 = smul.u32 2, %s22
          %s173 = ssub.s32 128, 128
          %174 = vsyncadd %s167, %s173
          %s175 = smul.addr %s21, 2
          %s176 = sadd.s32 %s171, %s175
          %s177 = smul.addr %s176, 64
          %s178 = scalar_lea.hbm %s0, %s177
          %s180 = sshll.u32 %s170, 4
          %s181 = int_to_ptr.vmem [resolvable:$true] %s180
          %183 = dma.hbm_to_vmem [thread:$0]  %s178, 128, %s181, %s167
        $region28: #{tpu_custom_call.1} parent=23 // pred_fallthru
          _
      $region24: #{tpu_custom_call.1} parent=5 // pred_fallthru
        _
      %p184 = scmp.le.s32.totalorder 1, %s14
      %p185 = scmp.lt.s32.totalorder %s14, 3
      %p186 = pnand %p184, %p185
      %p187 = pneg %p186
      // Predicated region
      $region29: #{tpu_custom_call.1} parent=5 // pred_check
        _
      $region30: #{tpu_custom_call.1} parent=5 // pred_check_branch
        %189 = sbr.rel (%p186) target = $region32
      $region31: #{tpu_custom_call.1} parent=5 // pred_region
        %s190 = ssub.s32 %s14, 1
        %s191 = sand.u32 %s41, 1
        %s192 = scalar_lea.sflag [#allocation3], %s191
        %s193 = sand.u32 %s41, 1
        %s194 = smul.addr %s193, 8
        %s195 = scalar_lea.vmem [#allocation2], %s194
        // Predicated region
        $region33: #{tpu_custom_call.1} parent=31 // pred_check
          %p196 = pneg %p54
        $region34: #{tpu_custom_call.1} parent=31 // pred_check_branch
          %198 = sbr.rel (%p196) target = $region36
        $region35: #{tpu_custom_call.1} parent=31 // pred_region
          %199 = dma.done %s192, 128
        $region36: #{tpu_custom_call.1} parent=31 // pred_fallthru
          _
        %s200 = sand.u32 %s41, 1
        %s201 = scalar_lea.sflag [#allocation3], %s200
        %s202 = sand.u32 %s41, 1
        %s203 = smul.addr %s202, 8
        %s204 = scalar_lea.vmem [#allocation2], %s203
        %p205 = pneg %p54
        %p206 = pneg %p51
        %p207 = pneg %p75
        %p208 = pneg %p72
        %p209 = pneg %p96
        %p210 = pneg %p93
        %p211 = pneg %p117
        %p212 = pneg %p114
        %p213 = pneg %p138
        %p214 = pneg %p135
        %s215 = smul.u32 2, %s24
        %p216 = scmp.eq.s32.totalorder %s23, 0
        %p217 = scmp.eq.s32.totalorder %s24, 0
        %p218 = pnand %p216, %p217
        %p219 = pneg %p218
        // Predicated region
        $region37: #{tpu_custom_call.1} parent=31 // pred_check
          _
        $region38: #{tpu_custom_call.1} parent=31 // pred_check_branch
          %221 = sbr.rel (%p218) target = $region40
        $region39: #{tpu_custom_call.1} parent=31 // pred_region
          %vm222 = vcmask 3072
          %223 = vst.msk [vmem:[%s3] sm:$0xf] %vm222, 0.0
          %224 = vst.msk [vmem:[%s4] sm:$0xf] %vm222, 0.0
        $region40: #{tpu_custom_call.1} parent=31 // pred_fallthru
          _
        %v225 = vld [vmem:[%s195] sm:$0xff]
        %v226 = vld [vmem:[%s1] sm:$0xf]
        %228 = vset.pattern.permute.xlu0 0
        %229 = vperm.xlu0 %228, %v226
        %v230 = vpop.permute.xlu0 %229
        %v233 = vlaneseq
        %v234 = vshrl.u32 %v233, 7
        %v235 = vsub.s32 0, %v234
        %v236 = vrot.slane %v225, %v235
        %v237 = vlaneseq
        %v238 = vshrl.u32 %v237, 7
        %v239 = vsub.s32 4, %v238
        %v240 = vrot.slane %v225, %v239
        %v243 = vlaneseq
        %v244 = vshrl.u32 %v243, 7
        %v245 = vsub.s32 0, %v244
        %v246 = vrot.slane %v236, %v245
        %v247 = vlaneseq
        %v248 = vshrl.u32 %v247, 7
        %v249 = vsub.s32 0, %v248
        %v250 = vrot.slane %v240, %v249
        %v251 = vmul.f32 %v230, %v246
        %v252 = vmul.f32 %v230, %v250
        %253 = vset.pattern.permute.xlu0 1
        %254 = vperm.xlu0 %253, %v226
        %v255 = vpop.permute.xlu0 %254
        %v257 = vlaneseq
        %v258 = vshrl.u32 %v257, 7
        %v259 = vsub.s32 1, %v258
        %v260 = vrot.slane %v225, %v259
        %v261 = vlaneseq
        %v262 = vshrl.u32 %v261, 7
        %v263 = vsub.s32 5, %v262
        %v264 = vrot.slane %v225, %v263
        %v267 = vlaneseq
        %v268 = vshrl.u32 %v267, 7
        %v269 = vsub.s32 1, %v268
        %v270 = vrot.slane %v260, %v269
        %v271 = vlaneseq
        %v272 = vshrl.u32 %v271, 7
        %v273 = vsub.s32 1, %v272
        %v274 = vrot.slane %v264, %v273
        %v275 = vmul.f32 %v255, %v270
        %v276 = vmul.f32 %v255, %v274
        %v277 = vadd.f32 %v251, %v275
        %v278 = vadd.f32 %v252, %v276
        %279 = vset.pattern.permute.xlu0 2
        %280 = vperm.xlu0 %279, %v226
        %v281 = vpop.permute.xlu0 %280
        %v283 = vlaneseq
        %v284 = vshrl.u32 %v283, 7
        %v285 = vsub.s32 2, %v284
        %v286 = vrot.slane %v225, %v285
        %v287 = vlaneseq
        %v288 = vshrl.u32 %v287, 7
        %v289 = vsub.s32 6, %v288
        %v290 = vrot.slane %v225, %v289
        %v293 = vlaneseq
        %v294 = vshrl.u32 %v293, 7
        %v295 = vsub.s32 2, %v294
        %v296 = vrot.slane %v286, %v295
        %v297 = vlaneseq
        %v298 = vshrl.u32 %v297, 7
        %v299 = vsub.s32 2, %v298
        %v300 = vrot.slane %v290, %v299
        %v301 = vmul.f32 %v281, %v296
        %v302 = vmul.f32 %v281, %v300
        %v303 = vadd.f32 %v277, %v301
        %v304 = vadd.f32 %v278, %v302
        %305 = vset.pattern.permute.xlu0 3
        %306 = vperm.xlu0 %305, %v226
        %v307 = vpop.permute.xlu0 %306
        %v309 = vlaneseq
        %v310 = vshrl.u32 %v309, 7
        %v311 = vsub.s32 3, %v310
        %v312 = vrot.slane %v225, %v311
        %v313 = vlaneseq
        %v314 = vshrl.u32 %v313, 7
        %v315 = vsub.s32 7, %v314
        %v316 = vrot.slane %v225, %v315
        %v319 = vlaneseq
        %v320 = vshrl.u32 %v319, 7
        %v321 = vsub.s32 3, %v320
        %v322 = vrot.slane %v312, %v321
        %v323 = vlaneseq
        %v324 = vshrl.u32 %v323, 7
        %v325 = vsub.s32 3, %v324
        %v326 = vrot.slane %v316, %v325
        %v327 = vmul.f32 %v307, %v322
        %v328 = vmul.f32 %v307, %v326
        %v329 = vadd.f32 %v303, %v327
        %v330 = vadd.f32 %v304, %v328
        %v331 = vld [vmem:[%s2] sm:$0xf]
        %333 = vset.pattern.permute.xlu0 0
        %334 = vperm.xlu0 %333, %v331
        %v335 = vpop.permute.xlu0 %334
        %v337 = vadd.f32 %v329, %v335
        %v338 = vadd.f32 %v330, %v335
        %v339 = vld [vmem:[%s3] sm:$0xf]
        %vm340 = vcmask 1043456
        %v341 = vsel %vm340, %v337, 0.0
        %v342 = vsel %vm340, %v338, 0.0
        %v343 = vadd.f32 %v341, %v342
        %344 = vadd.xlane.f32.xlu0 %v343
        %v345 = vpop.xlane.xlu0 %344
        %v346 = vadd.f32 %v339, %v345
        %vm347 = vcmask 3072
        %348 = vst.msk [vmem:[%s3] sm:$0xf] %vm347, %v346
        %v349 = vld [vmem:[%s4] sm:$0xf]
        %v350 = vmul.f32 %v337, %v337
        %v351 = vmul.f32 %v338, %v338
        %v352 = vsel %vm340, %v350, 0.0
        %v353 = vsel %vm340, %v351, 0.0
        %v354 = vadd.f32 %v352, %v353
        %355 = vadd.xlane.f32.xlu0 %v354
        %v356 = vpop.xlane.xlu0 %355
        %v357 = vadd.f32 %v349, %v356
        %358 = vst.msk [vmem:[%s4] sm:$0xf] %vm347, %v357
        // Predicated region
        $region41: #{tpu_custom_call.1} parent=31 // pred_check
          %p359 = pneg %p114
        $region42: #{tpu_custom_call.1} parent=31 // pred_check_branch
          %361 = sbr.rel (%p359) target = $region44
        $region43: #{tpu_custom_call.1} parent=31 // pred_region
          _
        $region44: #{tpu_custom_call.1} parent=31 // pred_fallthru
          _
        // Predicated region
        $region45: #{tpu_custom_call.1} parent=31 // pred_check
          %p362 = pneg %p135
        $region46: #{tpu_custom_call.1} parent=31 // pred_check_branch
          %364 = sbr.rel (%p362) target = $region48
        $region47: #{tpu_custom_call.1} parent=31 // pred_region
          _
        $region48: #{tpu_custom_call.1} parent=31 // pred_fallthru
          _
        // Predicated region
        $region49: #{tpu_custom_call.1} parent=31 // pred_check
          %p365 = pneg %p114
        $region50: #{tpu_custom_call.1} parent=31 // pred_check_branch
          %367 = sbr.rel (%p365) target = $region52
        $region51: #{tpu_custom_call.1} parent=31 // pred_region
          _
        $region52: #{tpu_custom_call.1} parent=31 // pred_fallthru
          _
        // Predicated region
        $region53: #{tpu_custom_call.1} parent=31 // pred_check
          %p368 = pneg %p135
        $region54: #{tpu_custom_call.1} parent=31 // pred_check_branch
          %370 = sbr.rel (%p368) target = $region56
        $region55: #{tpu_custom_call.1} parent=31 // pred_region
          _
        $region56: #{tpu_custom_call.1} parent=31 // pred_fallthru
          _
      $region32: #{tpu_custom_call.1} parent=5 // pred_fallthru
        _
      %p371 = scmp.le.s32.totalorder 2, %s14
      // Predicated region
      $region57: #{tpu_custom_call.1} parent=5 // pred_check
        %p372 = pneg %p371
      $region58: #{tpu_custom_call.1} parent=5 // pred_check_branch
        %374 = sbr.rel (%p372) target = $region60
      $region59: #{tpu_custom_call.1} parent=5 // pred_region
        %s375 = ssub.s32 %s14, 2
      $region60: #{tpu_custom_call.1} parent=5 // pred_fallthru
        _
    $region6: #{tpu_custom_call.1} parent=1 // loop_footer
      %s18 = sadd.s32 1, %s14
    $region7: #{tpu_custom_call.1} parent=1 // loop_footer_branch
      %13 = sbr.rel target = $region3
    $region8: #{tpu_custom_call.1} parent=1 // loop_exit
      _
    %376 = vsyncpa [#allocation3], 1
    %s377 = scalar_lea.sflag [#allocation3], 1
    %378 = vsyncpa %s377, 1

</llo_original>
